<compile_context>
chip_gen: v5e
topology: v5e:2x2
jax: 0.10.0
libtpu: 0.0.40
codegen_flags: <defaults>
</compile_context>

<pallas_src>
import functools

import jax
import jax.numpy as jnp
from jax import lax
from jax.experimental import pallas as pl
from jax.experimental.pallas import tpu as pltpu


# ----------------------------- Pallas kernel --------------------------------

def _sharp_kernel(x_ref, o_ref, *, width):
    """Depthwise 3x3 sharpen on a block of image planes.

    x_ref: (PB, H, L) f32 — if L > width, columns [width, L) are zeros.
    o_ref: (PB, H, L) f32 — only columns [0, width) are meaningful.
    """
    x = x_ref[...]
    pb, h, lanes = x.shape

    # --- horizontal 3-tap (ones) sum: lane rotations (XLU slot) --------------
    left = pltpu.roll(x, shift=1, axis=2)             # col j <- col j-1
    right = pltpu.roll(x, shift=lanes - 1, axis=2)    # col j <- col j+1
    if lanes == width:
        # no zero padding columns: mask the wrap-around at the image border
        col = lax.broadcasted_iota(jnp.int32, x.shape, 2)
        left = jnp.where(col >= 1, left, 0.0)
        right = jnp.where(col <= width - 2, right, 0.0)
    # else: wrap-around lanes come from / land in the zero padding columns
    row3 = x + left + right                           # (PB, H, L)

    # --- vertical 3-tap (ones) sum: sublane-shifted copies, zero edge rows ---
    if h > 1:
        zrow = jnp.zeros((pb, 1, lanes), dtype=row3.dtype)
        up = jnp.concatenate([zrow, row3[:, : h - 1, :]], axis=1)   # row r <- r-1
        down = jnp.concatenate([row3[:, 1:, :], zrow], axis=1)      # row r <- r+1
        win = row3 + up + down
    else:
        win = row3

    # --- sharpen: 8*x - 8 neighbours == 9*x - 3x3 window sum -----------------
    o_ref[...] = 9.0 * x - win


# ----------------------------- wrapper ---------------------------------------

def _round_up(v, m):
    return (v + m - 1) // m * m


@jax.jit
def sharp_forward(x):
    """x: (N, C, H, W) float32 -> (N, C, H, W) float32.  Same semantics as the
    PyTorch Sharp_kernel forward (depthwise 3x3 sharpening conv, zero 'same'
    padding, stride 1, groups=C, no bias)."""
    n, c, h, w = x.shape
    nc = n * c
    lanes = _round_up(w, 128)                 # lane-dense width

    planes = x.reshape(nc, h, w).astype(jnp.float32)
    if lanes != w:                            # pad only when W % 128 != 0
        planes = jnp.pad(planes, ((0, 0), (0, 0), (0, lanes - w)))

    # --- tile over the plane axis: biggest block that stays well inside VMEM,
    # --- but keep >= 2 grid steps so "parallel" can shard across v7x's 2 TCs.
    plane_bytes = 4 * h * lanes
    pb = max(1, min(nc, (1 << 20) // max(plane_bytes, 1)))
    if pb >= nc and nc >= 2:
        pb = nc // 2
    while nc % pb:                            # avoid partial blocks
        pb -= 1
    grid = (nc // pb,)

    tile_bytes = 2 * pb * plane_bytes         # in + out tile per grid step
    # double-buffered tiles + in-kernel temporaries, with headroom; within the
    # scoped-VMEM capability of every chip (v5e/v6e 128 MiB, v7x 64 MiB).
    vmem_limit = int(min(64 << 20, max(4 << 20, 8 * tile_bytes)))

    out = pl.pallas_call(
        functools.partial(_sharp_kernel, width=w),
        out_shape=jax.ShapeDtypeStruct((nc, h, lanes), jnp.float32),
        grid=grid,
        in_specs=[pl.BlockSpec((pb, h, lanes), lambda i: (i, 0, 0))],
        out_specs=pl.BlockSpec((pb, h, lanes), lambda i: (i, 0, 0)),
        compiler_params=pltpu.CompilerParams(
            dimension_semantics=("parallel",),
            vmem_limit_bytes=vmem_limit,
        ),
    )(planes)

    if lanes != w:
        out = out[:, :, :w]
    return out.reshape(n, c, h, w)


# ----------------------------- pure-JAX reference ----------------------------

def sharp_reference(x):
    n, c, h, w = x.shape
    k = jnp.array([[-1., -1., -1.], [-1., 8., -1.], [-1., -1., -1.]], jnp.float32)
    w_dw = jnp.broadcast_to(k, (c, 1, 3, 3))
    return jax.lax.conv_general_dilated(
        x, w_dw, window_strides=(1, 1), padding="SAME",
        dimension_numbers=("NCHW", "OIHW", "NCHW"),
        feature_group_count=c)


# ----------------------------- main -------------------------------------------

if __name__ == "__main__":
    key = jax.random.PRNGKey(0)
    N, C, H, W = 2, 4, 16, 16
    x = jax.random.normal(key, (N, C, H, W), jnp.float32)

    out = jax.block_until_ready(sharp_forward(x))

    assert out.shape == (N, C, H, W), out.shape
    assert out.dtype == jnp.float32
    assert bool(jnp.all(jnp.isfinite(out)))

    ref = sharp_reference(x)
    assert bool(jnp.allclose(out, ref, atol=1e-4, rtol=1e-4)), \
        float(jnp.max(jnp.abs(out - ref)))

    print("KERNEL_OK")
</pallas_src>

<mosaic_0001>
module attributes {stable_mosaic.version = 11 : i64} {
  func.func @_sharp_kernel(%arg0: i32, %arg1: memref<4x16x128xf32, #tpu.memory_space<vmem>>, %arg2: memref<4x16x128xf32, #tpu.memory_space<vmem>>) attributes {dimension_semantics = [#tpu.dimension_semantics<parallel>], iteration_bounds = array<i64: 2>, scalar_prefetch = 0 : i64, scratch_operands = 0 : i64, tpu.core_type = #tpu.core_type<tc>, window_params = [{transform_indices = @transform_0, window_bounds = array<i64: 4, 16, 128>}, {transform_indices = @transform_1, window_bounds = array<i64: 4, 16, 128>}]} {
    %c0 = arith.constant 0 : index
    %c0_0 = arith.constant 0 : index
    %c0_1 = arith.constant 0 : index
    %0 = vector.load %arg1[%c0, %c0_0, %c0_1] : memref<4x16x128xf32, #tpu.memory_space<vmem>>, vector<4x16x128xf32>
    %c1_i32 = arith.constant 1 : i32
    %1 = tpu.dynamic_rotate %0 by %c1_i32 dim 2 : vector<4x16x128xf32>, i32 -> vector<4x16x128xf32>
    %c127_i32 = arith.constant 127 : i32
    %2 = tpu.dynamic_rotate %0 by %c127_i32 dim 2 : vector<4x16x128xf32>, i32 -> vector<4x16x128xf32>
    %3 = arith.addf %0, %1 : vector<4x16x128xf32>
    %4 = arith.addf %3, %2 : vector<4x16x128xf32>
    %cst = arith.constant 0.000000e+00 : f32
    %5 = vector.broadcast %cst : f32 to vector<4x1x128xf32>
    %6 = vector.extract_strided_slice %4 {offsets = [0, 0, 0], sizes = [4, 15, 128], strides = [1, 1, 1]} : vector<4x16x128xf32> to vector<4x15x128xf32>
    %7 = tpu.concatenate %5, %6 in 1 : vector<4x1x128xf32>, vector<4x15x128xf32> -> vector<4x16x128xf32>
    %8 = vector.extract_strided_slice %4 {offsets = [0, 1, 0], sizes = [4, 15, 128], strides = [1, 1, 1]} : vector<4x16x128xf32> to vector<4x15x128xf32>
    %9 = tpu.concatenate %8, %5 in 1 : vector<4x15x128xf32>, vector<4x1x128xf32> -> vector<4x16x128xf32>
    %10 = arith.addf %4, %7 : vector<4x16x128xf32>
    %11 = arith.addf %10, %9 : vector<4x16x128xf32>
    %cst_2 = arith.constant 9.000000e+00 : f32
    %12 = vector.broadcast %cst_2 : f32 to vector<4x16x128xf32>
    %13 = arith.mulf %12, %0 : vector<4x16x128xf32>
    %14 = arith.subf %13, %11 : vector<4x16x128xf32>
    %c0_3 = arith.constant 0 : index
    %c0_4 = arith.constant 0 : index
    %c0_5 = arith.constant 0 : index
    %15 = vector.load %arg2[%c0_3, %c0_4, %c0_5] : memref<4x16x128xf32, #tpu.memory_space<vmem>>, vector<4x16x128xf32>
    tpu.vector_store %arg2[%c0_3, %c0_4, %c0_5], %14 {strides = array<i32>} : memref<4x16x128xf32, #tpu.memory_space<vmem>>, vector<4x16x128xf32>,
    return
  }
  func.func @transform_0(%arg0: i32) -> (i32, i32, i32) {
    %c0_i32 = arith.constant 0 : i32
    %c0_i32_0 = arith.constant 0 : i32
    %c0_i32_1 = arith.constant 0 : i32
    return %arg0, %c0_i32, %c0_i32_0 : i32, i32, i32
  }
  func.func @transform_1(%arg0: i32) -> (i32, i32, i32) {
    %c0_i32 = arith.constant 0 : i32
    %c0_i32_0 = arith.constant 0 : i32
    %c0_i32_1 = arith.constant 0 : i32
    return %arg0, %c0_i32, %c0_i32_0 : i32, i32, i32
  }
}

</mosaic_0001>

<llo_original>
// kernel: sharp_forward.1
$region0: #{sharp_forward.1}
  #allocation0 [shape = 'u32[]', space=smem, size = 0x4, offset = 0x4, fixed_abs, tag = 'smem constant byte address 0x4 - core index']
  #allocation1 [shape = 'u32[72,128]{1,0:T(1,128)}', space=vmem, size = 0x9000, scoped, tag = 'internal scratch']
  %s0 = inlined_call_operand.vmem [shape: f32[8,16,128], index: 0, kind: input, shape index: {}]
  %s1 = inlined_call_operand.hbm [shape: f32[8,16,128], index: 1, kind: output, shape index: {}]
  %s2 = sld [smem:[#allocation0]]
  $region37: #{sharp_forward.1} parent=0
    _
  %s4 = ssub.s32 1, %s2
  %s5 = scalar_select 0, %s4, %s2
  $region1: #{sharp_forward.1} parent=0
    #allocation2 [shape = 'u8[65536]{0}', space=vmem, size = 0x10000, scoped, tag = 'output window, operand 0']
    #allocation3 [shape = 's32[2]{0}', space=sflag, size = 0x8, scoped, tag = 'scoped memory for sharp_forward.1']
    %6 = vsyncpa [#allocation3], 0
    %s7 = scalar_lea.sflag [#allocation3], 1
    %8 = vsyncpa %s7, 0
    loop: start=0, step=1, limit=4
    $region2: #{sharp_forward.1} parent=1 // loop_pre_header
      _
    $region3: #{sharp_forward.1} parent=1 // loop_header
      %s10 = sphi 0, %s14
      %p11 = scmp.ge.s32.totalorder %s10, 4
      %s20 = sphi 0, %s22
      %s23 = sphi 0, %s20
      %s24 = sphi 0, %s23
      %s40 = sphi 0, %s24
      %s46 = sphi 0, %s48
      %s49 = sphi 0, %s46
      %s50 = sphi 0, %s49
      %s66 = sphi 0, %s50
    $region4: #{sharp_forward.1} parent=1 // loop_header_branch
      %13 = sbr.rel (%p11) target = $region8
    $region5: #{sharp_forward.1} parent=1 // loop_body
      %s15 = ssub.s32 %s10, 1
      %s16 = ssub.s32 %s10, 2
      %s17 = sadd.s32 %s10, 1
      %s18 = ssub.s32 %s10, %s17
      %p19 = scmp.eq.s32.totalorder %s18, 0
      %s21 = sadd.s32 %s20, 1
      %s22 = scalar_select %p19, %s20, %s21
      %p25 = pneg %p19
      %p26 = scmp.eq.s32.totalorder %s10, 1
      %p27 = por %p25, %p26
      %p28 = scmp.ne.s32.totalorder %s20, %s23
      %p29 = scmp.eq.s32.totalorder %s10, 0
      %p30 = por %p28, %p29
      %p31 = scmp.ne.s32.totalorder %s20, %s23
      %p32 = scmp.eq.s32.totalorder %s15, 1
      %p33 = por %p31, %p32
      %p34 = scmp.ne.s32.totalorder %s23, %s24
      %p35 = scmp.eq.s32.totalorder %s15, 0
      %p36 = por %p34, %p35
      %p37 = scmp.ne.s32.totalorder %s23, %s24
      %p38 = scmp.eq.s32.totalorder %s16, 1
      %p39 = por %p37, %p38
      %p41 = scmp.ne.s32.totalorder %s24, %s40
      %p42 = scmp.eq.s32.totalorder %s16, 0
      %p43 = por %p41, %p42
      %s44 = ssub.s32 %s10, %s17
      %p45 = scmp.eq.s32.totalorder %s44, 0
      %s47 = sadd.s32 %s46, 1
      %s48 = scalar_select %p45, %s46, %s47
      %p51 = pneg %p45
      %p52 = scmp.eq.s32.totalorder %s10, 1
      %p53 = por %p51, %p52
      %p54 = scmp.ne.s32.totalorder %s46, %s49
      %p55 = scmp.eq.s32.totalorder %s10, 0
      %p56 = por %p54, %p55
      %p57 = scmp.ne.s32.totalorder %s46, %s49
      %p58 = scmp.eq.s32.totalorder %s15, 1
      %p59 = por %p57, %p58
      %p60 = scmp.ne.s32.totalorder %s49, %s50
      %p61 = scmp.eq.s32.totalorder %s15, 0
      %p62 = por %p60, %p61
      %p63 = scmp.ne.s32.totalorder %s49, %s50
      %p64 = scmp.eq.s32.totalorder %s16, 1
      %p65 = por %p63, %p64
      %p67 = scmp.ne.s32.totalorder %s50, %s66
      %p68 = scmp.eq.s32.totalorder %s16, 0
      %p69 = por %p67, %p68
      %p70 = scmp.le.s32.totalorder 1, %s10
      %p71 = scmp.lt.s32.totalorder %s10, 3
      %p72 = pnand %p70, %p71
      %p73 = pneg %p72
      // Predicated region
      $region9: #{sharp_forward.1} parent=5 // pred_check
        _
      $region10: #{sharp_forward.1} parent=5 // pred_check_branch
        %75 = sbr.rel (%p72) target = $region12
      $region11: #{sharp_forward.1} parent=5 // pred_region
        %s76 = ssub.s32 %s10, 1
      $region12: #{sharp_forward.1} parent=5 // pred_fallthru
        _
      %p77 = scmp.lt.s32.totalorder %s10, 2
      // Predicated region
      $region13: #{sharp_forward.1} parent=5 // pred_check
        %p78 = pneg %p77
      $region14: #{sharp_forward.1} parent=5 // pred_check_branch
        %80 = sbr.rel (%p78) target = $region16
      $region15: #{sharp_forward.1} parent=5 // pred_region
        // Predicated region
        $region17: #{sharp_forward.1} parent=15 // pred_check
          %p81 = pneg %p30
        $region18: #{sharp_forward.1} parent=15 // pred_check_branch
          %83 = sbr.rel (%p81) target = $region20
        $region19: #{sharp_forward.1} parent=15 // pred_region
          %s84 = smul.u32 4, %s10
          %p85 = scmp.lt.s32.totalorder %s84, 7
          %s86 = scalar_select %p85, %s84, 7
          %s87 = smul.addr %s86, 2
          %s88 = smul.addr %s87, 8
          %s89 = scalar_lea.vmem %s0, %s88
          %s90 = smul.u32 4, %s10
        $region20: #{sharp_forward.1} parent=15 // pred_fallthru
          _
      $region16: #{sharp_forward.1} parent=5 // pred_fallthru
        _
      %p91 = scmp.le.s32.totalorder 1, %s10
      %p92 = scmp.lt.s32.totalorder %s10, 3
      %p93 = pnand %p91, %p92
      %p94 = pneg %p93
      // Predicated region
      $region21: #{sharp_forward.1} parent=5 // pred_check
        _
      $region22: #{sharp_forward.1} parent=5 // pred_check_branch
        %96 = sbr.rel (%p93) target = $region24
      $region23: #{sharp_forward.1} parent=5 // pred_region
        %s97 = ssub.s32 %s10, 1
        %s98 = smul.u32 4, %s15
        %p99 = scmp.lt.s32.totalorder %s98, 7
        %s100 = scalar_select %p99, %s98, 7
        %s101 = smul.addr %s100, 2
        %s102 = smul.addr %s101, 8
        %s103 = scalar_lea.vmem %s0, %s102
        %p104 = pneg %p36
        %p105 = pneg %p33
        %p106 = pneg %p62
        %p107 = pneg %p59
        %s108 = sand.u32 %s49, 1
        %s109 = scalar_lea.sflag [#allocation3], %s108
        %s110 = sand.u32 %s49, 1
        %s111 = smul.addr %s110, 64
        %s112 = scalar_lea.vmem [#allocation2], %s111
        %s113 = smul.u32 4, %s15
        %p114 = scmp.lt.s32.totalorder %s113, 7
        %s115 = scalar_select %p114, %s113, 7
        %s116 = smul.addr %s115, 2
        %s117 = smul.addr %s116, 8
        %s118 = scalar_lea.vmem %s0, %s117
        %s119 = smul.u32 4, %s15
        %s120 = smul.u32 4, %s15
        %v121 = vld [vmem:[%s118] sm:$0xff]
        %v122 = vld [vmem:[%s118 + $0x8] sm:$0xff]
        %v123 = vld [vmem:[%s118 + $0x10] sm:$0xff]
        %v124 = vld [vmem:[%s118 + $0x18] sm:$0xff]
        %v125 = vld [vmem:[%s118 + $0x20] sm:$0xff]
        %v126 = vld [vmem:[%s118 + $0x28] sm:$0xff]
        %v127 = vld [vmem:[%s118 + $0x30] sm:$0xff]
        %v128 = vld [vmem:[%s118 + $0x38] sm:$0xff]
        %129 = vrot.lane.b32.xlu0 %v121, 1
        %v130 = vpop.permute.xlu0 %129
        %131 = vrot.lane.b32.xlu0 %v122, 1
        %v132 = vpop.permute.xlu0 %131
        %133 = vrot.lane.b32.xlu0 %v123, 1
        %v134 = vpop.permute.xlu0 %133
        %135 = vrot.lane.b32.xlu0 %v124, 1
        %v136 = vpop.permute.xlu0 %135
        %137 = vrot.lane.b32.xlu0 %v125, 1
        %v138 = vpop.permute.xlu0 %137
        %139 = vrot.lane.b32.xlu0 %v126, 1
        %v140 = vpop.permute.xlu0 %139
        %141 = vrot.lane.b32.xlu0 %v127, 1
        %v142 = vpop.permute.xlu0 %141
        %143 = vrot.lane.b32.xlu0 %v128, 1
        %v144 = vpop.permute.xlu0 %143
        %145 = vrot.lane.b32.xlu0 %v121, 127
        %v146 = vpop.permute.xlu0 %145
        %147 = vrot.lane.b32.xlu0 %v122, 127
        %v148 = vpop.permute.xlu0 %147
        %149 = vrot.lane.b32.xlu0 %v123, 127
        %v150 = vpop.permute.xlu0 %149
        %151 = vrot.lane.b32.xlu0 %v124, 127
        %v152 = vpop.permute.xlu0 %151
        %153 = vrot.lane.b32.xlu0 %v125, 127
        %v154 = vpop.permute.xlu0 %153
        %155 = vrot.lane.b32.xlu0 %v126, 127
        %v156 = vpop.permute.xlu0 %155
        %157 = vrot.lane.b32.xlu0 %v127, 127
        %v158 = vpop.permute.xlu0 %157
        %159 = vrot.lane.b32.xlu0 %v128, 127
        %v160 = vpop.permute.xlu0 %159
        %v161 = vadd.f32 %v121, %v130
        %v162 = vadd.f32 %v122, %v132
        %v163 = vadd.f32 %v123, %v134
        %v164 = vadd.f32 %v124, %v136
        %v165 = vadd.f32 %v125, %v138
        %v166 = vadd.f32 %v126, %v140
        %v167 = vadd.f32 %v127, %v142
        %v168 = vadd.f32 %v128, %v144
        %v169 = vadd.f32 %v161, %v146
        %v170 = vadd.f32 %v162, %v148
        %v171 = vadd.f32 %v163, %v150
        %v172 = vadd.f32 %v164, %v152
        %v173 = vadd.f32 %v165, %v154
        %v174 = vadd.f32 %v166, %v156
        %v175 = vadd.f32 %v167, %v158
        %v176 = vadd.f32 %v168, %v160
        %vm185 = vcmask 1040384
        %v186 = vrot.slane %v169, 7
        %v187 = vrot.slane %v170, 7
        %v188 = vsel %vm185, %v186, %v187
        %v189 = vrot.slane %v171, 7
        %v190 = vrot.slane %v172, 7
        %v191 = vsel %vm185, %v189, %v190
        %v192 = vrot.slane %v173, 7
        %v193 = vrot.slane %v174, 7
        %v194 = vsel %vm185, %v192, %v193
        %v195 = vrot.slane %v175, 7
        %v196 = vrot.slane %v176, 7
        %v197 = vsel %vm185, %v195, %v196
        %v206 = vsel %vm185, 0.0, %v186
        %v207 = vsel %vm185, 0.0, %v189
        %v208 = vsel %vm185, 0.0, %v192
        %v209 = vsel %vm185, 0.0, %v195
        %vm210 = vcmask 1046528
        %v211 = vrot.slane %v169, 1
        %v212 = vrot.slane %v170, 1
        %v213 = vsel %vm210, %v211, %v212
        %v214 = vrot.slane %v171, 1
        %v215 = vrot.slane %v172, 1
        %v216 = vsel %vm210, %v214, %v215
        %v217 = vrot.slane %v173, 1
        %v218 = vrot.slane %v174, 1
        %v219 = vsel %vm210, %v217, %v218
        %v220 = vrot.slane %v175, 1
        %v221 = vrot.slane %v176, 1
        %v222 = vsel %vm210, %v220, %v221
        %v231 = vsel %vm210, %v212, 0.0
        %v232 = vsel %vm210, %v215, 0.0
        %v233 = vsel %vm210, %v218, 0.0
        %v234 = vsel %vm210, %v221, 0.0
        %v235 = vadd.f32 %v169, %v206
        %v236 = vadd.f32 %v170, %v188
        %v237 = vadd.f32 %v171, %v207
        %v238 = vadd.f32 %v172, %v191
        %v239 = vadd.f32 %v173, %v208
        %v240 = vadd.f32 %v174, %v194
        %v241 = vadd.f32 %v175, %v209
        %v242 = vadd.f32 %v176, %v197
        %v243 = vadd.f32 %v235, %v213
        %v244 = vadd.f32 %v236, %v231
        %v245 = vadd.f32 %v237, %v216
        %v246 = vadd.f32 %v238, %v232
        %v247 = vadd.f32 %v239, %v219
        %v248 = vadd.f32 %v240, %v233
        %v249 = vadd.f32 %v241, %v222
        %v250 = vadd.f32 %v242, %v234
        %v251 = vmul.f32 %v121, 9.0
        %v252 = vmul.f32 %v122, 9.0
        %v253 = vmul.f32 %v123, 9.0
        %v254 = vmul.f32 %v124, 9.0
        %v255 = vmul.f32 %v125, 9.0
        %v256 = vmul.f32 %v126, 9.0
        %v257 = vmul.f32 %v127, 9.0
        %v258 = vmul.f32 %v128, 9.0
        %v259 = vsub.f32 %v251, %v243
        %v260 = vsub.f32 %v252, %v244
        %v261 = vsub.f32 %v253, %v245
        %v262 = vsub.f32 %v254, %v246
        %v263 = vsub.f32 %v255, %v247
        %v264 = vsub.f32 %v256, %v248
        %v265 = vsub.f32 %v257, %v249
        %v266 = vsub.f32 %v258, %v250
        %267 = vst [vmem:[%s112] sm:$0xff] %v259
        %268 = vst [vmem:[%s112 + $0x8] sm:$0xff] %v260
        %269 = vst [vmem:[%s112 + $0x10] sm:$0xff] %v261
        %270 = vst [vmem:[%s112 + $0x18] sm:$0xff] %v262
        %271 = vst [vmem:[%s112 + $0x20] sm:$0xff] %v263
        %272 = vst [vmem:[%s112 + $0x28] sm:$0xff] %v264
        %273 = vst [vmem:[%s112 + $0x30] sm:$0xff] %v265
        %274 = vst [vmem:[%s112 + $0x38] sm:$0xff] %v266
        %s275 = sand.u32 %s49, 1
        %s276 = scalar_lea.sflag [#allocation3], %s275
        %s277 = sand.u32 %s49, 1
        %s278 = smul.addr %s277, 64
        %s279 = scalar_lea.vmem [#allocation2], %s278
        // Predicated region
        $region25: #{sharp_forward.1} parent=23 // pred_check
          %p280 = pneg %p59
        $region26: #{sharp_forward.1} parent=23 // pred_check_branch
          %282 = sbr.rel (%p280) target = $region28
        $region27: #{sharp_forward.1} parent=23 // pred_region
          %s283 = smul.u32 4, %s15
          %285 = vsyncadd %s276, 0
          %s286 = smul.addr %s283, 2
          %s287 = smul.addr %s286, 8
          %s288 = scalar_lea.hbm %s1, %s287
          %s289 = sshll.u32 %s279, 4
          %s290 = int_to_ptr.vmem [resolvable:$true] %s289
          %s291 = sshll.u32 %s288, 4
          %s292 = int_to_ptr.hbm [resolvable:$true] %s291
          %297 = dma.vmem_to_hbm [thread:$0]  %s290, 1024, %s292, %s276, 128, 128, 8
        $region28: #{sharp_forward.1} parent=23 // pred_fallthru
          _
      $region24: #{sharp_forward.1} parent=5 // pred_fallthru
        _
      %p298 = scmp.le.s32.totalorder 2, %s10
      // Predicated region
      $region29: #{sharp_forward.1} parent=5 // pred_check
        %p299 = pneg %p298
      $region30: #{sharp_forward.1} parent=5 // pred_check_branch
        %301 = sbr.rel (%p299) target = $region32
      $region31: #{sharp_forward.1} parent=5 // pred_region
        %s302 = ssub.s32 %s10, 2
        // Predicated region
        $region33: #{sharp_forward.1} parent=31 // pred_check
          %p303 = pneg %p65
        $region34: #{sharp_forward.1} parent=31 // pred_check_branch
          %305 = sbr.rel (%p303) target = $region36
        $region35: #{sharp_forward.1} parent=31 // pred_region
          %s306 = sand.u32 %s50, 1
          %s307 = scalar_lea.sflag [#allocation3], %s306
          %s308 = sand.u32 %s50, 1
          %s309 = smul.addr %s308, 64
          %s310 = scalar_lea.vmem [#allocation2], %s309
          %312 = dma.done %s307, 1024
        $region36: #{sharp_forward.1} parent=31 // pred_fallthru
          _
      $region32: #{sharp_forward.1} parent=5 // pred_fallthru
        _
    $region6: #{sharp_forward.1} parent=1 // loop_footer
      %s14 = sadd.s32 1, %s10
    $region7: #{sharp_forward.1} parent=1 // loop_footer_branch
      %9 = sbr.rel target = $region3
    $region8: #{sharp_forward.1} parent=1 // loop_exit
      _
    %313 = vsyncpa [#allocation3], 1
    %s314 = scalar_lea.sflag [#allocation3], 1
    %315 = vsyncpa %s314, 1

</llo_original>
